<compile_context>
chip_gen: v6e
topology: v6e:2x2x1
jax: 0.10.0
libtpu: 0.0.40
codegen_flags: <defaults>
</compile_context>

<pallas_src>
import jax
import jax.numpy as jnp
from jax import lax
from jax.experimental import pallas as pl
from jax.experimental.pallas import tpu as pltpu


def _vmem_limit_bytes(need_bytes, *, headroom=2.0, floor=16 << 20, ceiling=64 << 20):
    """Scoped-VMEM request derived from the actual tile budget (v7x-safe cap)."""
    return int(max(floor, min(need_bytes * headroom, ceiling)))


# ---------------------------------------------------------------------------
# Kernel 1: one-shot QKV projection (q pre-scaled by 1/sqrt(C)).
# ---------------------------------------------------------------------------
def _qkv_proj_kernel(x_ref, wq_ref, wk_ref, wv_ref, q_ref, k_ref, v_ref):
    # x_ref: (tr, C); wq/wk/wv: (C, H); q/k/v out: (tr, H)
    C = x_ref.shape[-1]
    scale = 1.0 / (C ** 0.5)
    x = x_ref[...]
    # Three lane-aligned dots; f32 accumulation, store back in the native dtype.
    q = jnp.dot(x, wq_ref[...], preferred_element_type=jnp.float32)
    q_ref[...] = (q * scale).astype(q_ref.dtype)
    k_ref[...] = jnp.dot(x, wk_ref[...],
                         preferred_element_type=jnp.float32).astype(k_ref.dtype)
    v_ref[...] = jnp.dot(x, wv_ref[...],
                         preferred_element_type=jnp.float32).astype(v_ref.dtype)


def _project_qkv(x, w_key, w_query, w_value, *, tr):
    B, T, C = x.shape
    H = w_key.shape[1]
    tr = min(tr, T)
    if T % tr:
        raise ValueError(f"T={T} must be divisible by row tile tr={tr}")

    itemsize = jnp.dtype(x.dtype).itemsize
    need = (2 * tr * C * itemsize          # double-buffered x tile
            + 2 * 3 * C * H * itemsize     # resident (double-buffered) weights
            + 2 * 3 * tr * H * itemsize)   # double-buffered q/k/v output tiles

    row_spec = pl.BlockSpec((pl.Squeezed(), tr, H), lambda b, ri: (b, ri, 0))
    return pl.pallas_call(
        _qkv_proj_kernel,
        out_shape=tuple(jax.ShapeDtypeStruct((B, T, H), x.dtype) for _ in range(3)),
        grid_spec=pltpu.PrefetchScalarGridSpec(
            num_scalar_prefetch=0,
            grid=(B, T // tr),
            in_specs=[
                pl.BlockSpec((pl.Squeezed(), tr, C), lambda b, ri: (b, ri, 0)),
                pl.BlockSpec((C, H), lambda b, ri: (0, 0)),
                pl.BlockSpec((C, H), lambda b, ri: (0, 0)),
                pl.BlockSpec((C, H), lambda b, ri: (0, 0)),
            ],
            out_specs=[row_spec, row_spec, row_spec],
        ),
        compiler_params=pltpu.CompilerParams(
            dimension_semantics=("parallel", "parallel"),
            vmem_limit_bytes=_vmem_limit_bytes(need),
        ),
    )(x, w_query, w_key, w_value)


# ---------------------------------------------------------------------------
# Kernel 2: flash-style attention over precomputed (scaled) q, k, v.
# ---------------------------------------------------------------------------
def _flash_attn_kernel(q_ref, k_ref, v_ref, o_ref, m_scr, l_scr, acc_scr):
    # q_ref: (tq, H); k_ref/v_ref: (tk, H); o_ref: (tq, H)
    ki = pl.program_id(2)

    @pl.when(ki == 0)
    def _init():
        m_scr[...] = jnp.full(m_scr.shape, -jnp.inf, dtype=m_scr.dtype)
        l_scr[...] = jnp.zeros_like(l_scr)
        acc_scr[...] = jnp.zeros_like(acc_scr)

    # Scores: contract q and k over H (MXU-native A @ B^T, no built transpose).
    s = lax.dot_general(q_ref[...], k_ref[...],
                        dimension_numbers=(((1,), (1,)), ((), ())),
                        preferred_element_type=jnp.float32)        # (tq, tk)

    # Online softmax update (f32 bookkeeping) == F.softmax over the full row.
    m_prev = m_scr[...]
    m_new = jnp.maximum(m_prev, jnp.max(s, axis=-1, keepdims=True))
    alpha = jnp.exp(m_prev - m_new)
    p = jnp.exp(s - m_new)
    l_scr[...] = alpha * l_scr[...] + jnp.sum(p, axis=-1, keepdims=True)
    acc_scr[...] = alpha * acc_scr[...] + jnp.dot(
        p.astype(v_ref.dtype), v_ref[...], preferred_element_type=jnp.float32)
    m_scr[...] = m_new

    # Attention dropout == identity in eval mode.

    @pl.when(ki == pl.num_programs(2) - 1)
    def _finalize():
        inv_l = pl.reciprocal(l_scr[...], approx=False)   # EUP slot; exact
        o_ref[...] = (acc_scr[...] * inv_l).astype(o_ref.dtype)


def head_forward(x, w_key, w_query, w_value, *, tq=512, tk=512):
    """Single-head attention forward (matches PyTorch Head.forward, eval mode).

    x:        (B, T, C)
    w_key:    (C, H)   -- equals nn.Linear.weight.T
    w_query:  (C, H)
    w_value:  (C, H)
    returns:  (B, T, H)
    """
    B, T, C = x.shape
    H = w_key.shape[1]

    tq = min(tq, T)
    tk = min(tk, T)
    if T % tq or T % tk:
        raise ValueError(f"T={T} must be divisible by tile sizes tq={tq}, tk={tk}")

    # Stage 1: project q/k/v once per batch (q pre-scaled by 1/sqrt(C)).
    q, k, v = _project_qkv(x, w_key, w_query, w_value, tr=max(tq, tk))

    # Stage 2: flash attention over the precomputed q/k/v tiles.
    itemsize = jnp.dtype(x.dtype).itemsize
    need = (2 * (2 * tq * H + 2 * tk * H) * itemsize   # dbl-buffered q/k/v/out tiles
            + (tq * H + 2 * tq) * 4)                   # f32 acc + m + l scratch

    grid = (B, T // tq, T // tk)
    return pl.pallas_call(
        _flash_attn_kernel,
        out_shape=jax.ShapeDtypeStruct((B, T, H), x.dtype),
        grid_spec=pltpu.PrefetchScalarGridSpec(
            num_scalar_prefetch=0,
            grid=grid,
            in_specs=[
                pl.BlockSpec((pl.Squeezed(), tq, H), lambda b, qi, ki: (b, qi, 0)),
                pl.BlockSpec((pl.Squeezed(), tk, H), lambda b, qi, ki: (b, ki, 0)),
                pl.BlockSpec((pl.Squeezed(), tk, H), lambda b, qi, ki: (b, ki, 0)),
            ],
            out_specs=pl.BlockSpec((pl.Squeezed(), tq, H),
                                   lambda b, qi, ki: (b, qi, 0)),
            scratch_shapes=[
                pltpu.VMEM((tq, 1), jnp.float32),   # running max m
                pltpu.VMEM((tq, 1), jnp.float32),   # running denom l
                pltpu.VMEM((tq, H), jnp.float32),   # output accumulator
            ],
        ),
        compiler_params=pltpu.CompilerParams(
            dimension_semantics=("parallel", "parallel", "arbitrary"),
            vmem_limit_bytes=_vmem_limit_bytes(need),
        ),
    )(q, k, v)


def _reference(x, wk, wq, wv):
    # Pure-JAX reference mirroring the PyTorch forward (eval mode, no mask).
    B, T, C = x.shape
    k = x @ wk
    q = x @ wq
    v = x @ wv
    wei = (q @ jnp.swapaxes(k, -2, -1)) / (C ** 0.5)
    wei = jax.nn.softmax(wei, axis=-1)
    return wei @ v


if __name__ == "__main__":
    # Small shapes consistent with the module: batch=2, seq=8, embedding=32, head=16.
    B, T, C, H = 2, 8, 32, 16

    key = jax.random.PRNGKey(0)
    kx, kk, kq, kv = jax.random.split(key, 4)

    x = jax.random.normal(kx, (B, T, C), dtype=jnp.float32)
    # Deterministic parameter init (stand-in for nn.Linear weights, stored transposed).
    w_key = jax.random.normal(kk, (C, H), dtype=jnp.float32) * 0.1
    w_query = jax.random.normal(kq, (C, H), dtype=jnp.float32) * 0.1
    w_value = jax.random.normal(kv, (C, H), dtype=jnp.float32) * 0.1

    out = head_forward(x, w_key, w_query, w_value)
    out = jax.block_until_ready(out)

    ref = _reference(x, w_key, w_query, w_value)
    assert out.shape == (B, T, H)
    assert jnp.allclose(out, ref, atol=1e-4, rtol=1e-4), "mismatch vs reference"

    print("KERNEL_OK")
</pallas_src>

<mosaic_0001>
module attributes {stable_mosaic.version = 11 : i64} {
  func.func @_qkv_proj_kernel(%arg0: i32, %arg1: i32, %arg2: memref<1x8x32xf32, #tpu.memory_space<vmem>>, %arg3: memref<32x16xf32, #tpu.memory_space<vmem>>, %arg4: memref<32x16xf32, #tpu.memory_space<vmem>>, %arg5: memref<32x16xf32, #tpu.memory_space<vmem>>, %arg6: memref<1x8x16xf32, #tpu.memory_space<vmem>>, %arg7: memref<1x8x16xf32, #tpu.memory_space<vmem>>, %arg8: memref<1x8x16xf32, #tpu.memory_space<vmem>>) attributes {dimension_semantics = [#tpu.dimension_semantics<parallel>, #tpu.dimension_semantics<parallel>], iteration_bounds = array<i64: 2, 1>, scalar_prefetch = 0 : i64, scratch_operands = 0 : i64, tpu.core_type = #tpu.core_type<tc>, window_params = [{transform_indices = @transform_0, window_bounds = array<i64: 1, 8, 32>}, {pipeline_mode = #tpu.pipeline_mode<synchronous>, transform_indices = @transform_1, window_bounds = array<i64: 32, 16>}, {pipeline_mode = #tpu.pipeline_mode<synchronous>, transform_indices = @transform_2, window_bounds = array<i64: 32, 16>}, {pipeline_mode = #tpu.pipeline_mode<synchronous>, transform_indices = @transform_3, window_bounds = array<i64: 32, 16>}, {transform_indices = @transform_4, window_bounds = array<i64: 1, 8, 16>}, {transform_indices = @transform_5, window_bounds = array<i64: 1, 8, 16>}, {transform_indices = @transform_6, window_bounds = array<i64: 1, 8, 16>}]} {
    %c0 = arith.constant 0 : index
    %c0_0 = arith.constant 0 : index
    %c0_1 = arith.constant 0 : index
    %0 = vector.load %arg2[%c0, %c0_0, %c0_1] : memref<1x8x32xf32, #tpu.memory_space<vmem>>, vector<1x8x32xf32>
    %1 = vector.shape_cast %0 : vector<1x8x32xf32> to vector<8x32xf32>
    %c0_2 = arith.constant 0 : index
    %c0_3 = arith.constant 0 : index
    %2 = vector.load %arg3[%c0_2, %c0_3] : memref<32x16xf32, #tpu.memory_space<vmem>>, vector<32x16xf32>
    %cst = arith.constant dense<0.000000e+00> : vector<8x16xf32>
    %3 = tpu.matmul %1, %2, %cst {dimension_numbers = #tpu.dot_dimension_numbers<[1], [0], [0], [1], [0, 0, 1, 1], [], []>} : vector<8x32xf32>, vector<32x16xf32>, vector<8x16xf32> -> vector<8x16xf32>
    %cst_4 = arith.constant 0.176776692 : f32
    %4 = vector.broadcast %cst_4 : f32 to vector<8x16xf32>
    %5 = arith.mulf %3, %4 : vector<8x16xf32>
    %c0_5 = arith.constant 0 : index
    %c0_6 = arith.constant 0 : index
    %c0_7 = arith.constant 0 : index
    %6 = vector.load %arg6[%c0_5, %c0_6, %c0_7] : memref<1x8x16xf32, #tpu.memory_space<vmem>>, vector<1x8x16xf32>
    %7 = vector.shape_cast %6 : vector<1x8x16xf32> to vector<8x16xf32>
    %8 = vector.shape_cast %5 : vector<8x16xf32> to vector<1x8x16xf32>
    tpu.vector_store %arg6[%c0_5, %c0_6, %c0_7], %8 {strides = array<i32>} : memref<1x8x16xf32, #tpu.memory_space<vmem>>, vector<1x8x16xf32>,
    %c0_8 = arith.constant 0 : index
    %c0_9 = arith.constant 0 : index
    %9 = vector.load %arg4[%c0_8, %c0_9] : memref<32x16xf32, #tpu.memory_space<vmem>>, vector<32x16xf32>
    %cst_10 = arith.constant dense<0.000000e+00> : vector<8x16xf32>
    %10 = tpu.matmul %1, %9, %cst_10 {dimension_numbers = #tpu.dot_dimension_numbers<[1], [0], [0], [1], [0, 0, 1, 1], [], []>} : vector<8x32xf32>, vector<32x16xf32>, vector<8x16xf32> -> vector<8x16xf32>
    %c0_11 = arith.constant 0 : index
    %c0_12 = arith.constant 0 : index
    %c0_13 = arith.constant 0 : index
    %11 = vector.load %arg7[%c0_11, %c0_12, %c0_13] : memref<1x8x16xf32, #tpu.memory_space<vmem>>, vector<1x8x16xf32>
    %12 = vector.shape_cast %11 : vector<1x8x16xf32> to vector<8x16xf32>
    %13 = vector.shape_cast %10 : vector<8x16xf32> to vector<1x8x16xf32>
    tpu.vector_store %arg7[%c0_11, %c0_12, %c0_13], %13 {strides = array<i32>} : memref<1x8x16xf32, #tpu.memory_space<vmem>>, vector<1x8x16xf32>,
    %c0_14 = arith.constant 0 : index
    %c0_15 = arith.constant 0 : index
    %14 = vector.load %arg5[%c0_14, %c0_15] : memref<32x16xf32, #tpu.memory_space<vmem>>, vector<32x16xf32>
    %cst_16 = arith.constant dense<0.000000e+00> : vector<8x16xf32>
    %15 = tpu.matmul %1, %14, %cst_16 {dimension_numbers = #tpu.dot_dimension_numbers<[1], [0], [0], [1], [0, 0, 1, 1], [], []>} : vector<8x32xf32>, vector<32x16xf32>, vector<8x16xf32> -> vector<8x16xf32>
    %c0_17 = arith.constant 0 : index
    %c0_18 = arith.constant 0 : index
    %c0_19 = arith.constant 0 : index
    %16 = vector.load %arg8[%c0_17, %c0_18, %c0_19] : memref<1x8x16xf32, #tpu.memory_space<vmem>>, vector<1x8x16xf32>
    %17 = vector.shape_cast %16 : vector<1x8x16xf32> to vector<8x16xf32>
    %18 = vector.shape_cast %15 : vector<8x16xf32> to vector<1x8x16xf32>
    tpu.vector_store %arg8[%c0_17, %c0_18, %c0_19], %18 {strides = array<i32>} : memref<1x8x16xf32, #tpu.memory_space<vmem>>, vector<1x8x16xf32>,
    return
  }
  func.func @transform_0(%arg0: i32, %arg1: i32) -> (i32, i32, i32) {
    %c0_i32 = arith.constant 0 : i32
    %c0_i32_0 = arith.constant 0 : i32
    return %arg0, %arg1, %c0_i32 : i32, i32, i32
  }
  func.func @transform_1(%arg0: i32, %arg1: i32) -> (i32, i32) {
    %c0_i32 = arith.constant 0 : i32
    %c0_i32_0 = arith.constant 0 : i32
    %c0_i32_1 = arith.constant 0 : i32
    return %c0_i32, %c0_i32_0 : i32, i32
  }
  func.func @transform_2(%arg0: i32, %arg1: i32) -> (i32, i32) {
    %c0_i32 = arith.constant 0 : i32
    %c0_i32_0 = arith.constant 0 : i32
    %c0_i32_1 = arith.constant 0 : i32
    return %c0_i32, %c0_i32_0 : i32, i32
  }
  func.func @transform_3(%arg0: i32, %arg1: i32) -> (i32, i32) {
    %c0_i32 = arith.constant 0 : i32
    %c0_i32_0 = arith.constant 0 : i32
    %c0_i32_1 = arith.constant 0 : i32
    return %c0_i32, %c0_i32_0 : i32, i32
  }
  func.func @transform_4(%arg0: i32, %arg1: i32) -> (i32, i32, i32) {
    %c0_i32 = arith.constant 0 : i32
    %c0_i32_0 = arith.constant 0 : i32
    return %arg0, %arg1, %c0_i32 : i32, i32, i32
  }
  func.func @transform_5(%arg0: i32, %arg1: i32) -> (i32, i32, i32) {
    %c0_i32 = arith.constant 0 : i32
    %c0_i32_0 = arith.constant 0 : i32
    return %arg0, %arg1, %c0_i32 : i32, i32, i32
  }
  func.func @transform_6(%arg0: i32, %arg1: i32) -> (i32, i32, i32) {
    %c0_i32 = arith.constant 0 : i32
    %c0_i32_0 = arith.constant 0 : i32
    return %arg0, %arg1, %c0_i32 : i32, i32, i32
  }
}

</mosaic_0001>

<llo_original>
// kernel: tpu_custom_call.1
$region0: #{tpu_custom_call.1}
  #allocation0 [shape = 'u32[]', space=smem, size = 0x4, offset = 0x4, fixed_abs, tag = 'smem constant byte address 0x4 - core index']
  #allocation1 [shape = 'u32[144,128]{1,0:T(1,128)}', space=vmem, size = 0x12000, scoped, tag = 'internal scratch']
  %s0 = inlined_call_operand.vmem [shape: f32[2,8,32], index: 0, kind: input, shape index: {}]
  %s1 = inlined_call_operand.vmem [shape: f32[32,16], index: 1, kind: input, shape index: {}]
  %s2 = inlined_call_operand.vmem [shape: f32[32,16], index: 2, kind: input, shape index: {}]
  %s3 = inlined_call_operand.vmem [shape: f32[32,16], index: 3, kind: input, shape index: {}]
  %s4 = inlined_call_operand.hbm [shape: f32[2,8,16], index: 4, kind: output, shape index: {0}]
  %s5 = inlined_call_operand.hbm [shape: f32[2,8,16], index: 5, kind: output, shape index: {1}]
  %s6 = inlined_call_operand.hbm [shape: f32[2,8,16], index: 6, kind: output, shape index: {2}]
  %7 = xla_tuple %s4, %s5, %s6
  %s8 = sld [smem:[#allocation0]]
  $region65: #{tpu_custom_call.1} parent=0
    _
  %s10 = ssub.s32 1, %s8
  %s11 = scalar_select 0, %s10, %s8
  $region1: #{tpu_custom_call.1} parent=0
    #allocation2 [shape = 'u8[8192]{0}', space=vmem, size = 0x2000, scoped, tag = 'output window, operand 0']
    #allocation3 [shape = 's32[2]{0}', space=sflag, size = 0x8, scoped, tag = 'scoped memory for tpu_custom_call.1']
    #allocation4 [shape = 'u8[8192]{0}', space=vmem, size = 0x2000, scoped, tag = 'output window, operand 1']
    #allocation5 [shape = 's32[2]{0}', space=sflag, size = 0x8, scoped, tag = 'scoped memory for tpu_custom_call.1']
    #allocation6 [shape = 'u8[8192]{0}', space=vmem, size = 0x2000, scoped, tag = 'output window, operand 2']
    %12 = vsyncpa [#allocation3], 0
    %s13 = scalar_lea.sflag [#allocation3], 1
    %14 = vsyncpa %s13, 0
    %15 = vsyncpa [#allocation5], 0
    %s16 = scalar_lea.sflag [#allocation5], 1
    %17 = vsyncpa %s16, 0
    loop: start=0, step=1, limit=4
    $region2: #{tpu_custom_call.1} parent=1 // loop_pre_header
      _
    $region3: #{tpu_custom_call.1} parent=1 // loop_header
      %s19 = sphi 0, %s23
      %p20 = scmp.ge.s32.totalorder %s19, 4
      %s26 = sphi 0, %s38
      %s27 = sphi 0, %s34
      %s28 = sphi 0, %s26
      %s29 = sphi 0, %s27
      %s30 = sphi 0, %s28
      %s31 = sphi 0, %s29
      %s43 = sphi 0, %s45
      %s46 = sphi 0, %s43
      %s47 = sphi 0, %s46
      %s63 = sphi 0, %s47
      %s67 = sphi 0, %s67
      %s69 = sphi 0, %s67
      %s70 = sphi 0, %s69
      %s84 = sphi 0, %s70
      %s88 = sphi 0, %s88
      %s90 = sphi 0, %s88
      %s91 = sphi 0, %s90
      %s105 = sphi 0, %s91
      %s109 = sphi 0, %s109
      %s111 = sphi 0, %s109
      %s112 = sphi 0, %s111
      %s126 = sphi 0, %s112
      %s134 = sphi 0, %s136
      %s137 = sphi 0, %s134
      %s138 = sphi 0, %s137
      %s154 = sphi 0, %s138
      %s162 = sphi 0, %s164
      %s165 = sphi 0, %s162
      %s166 = sphi 0, %s165
      %s182 = sphi 0, %s166
      %s190 = sphi 0, %s192
      %s193 = sphi 0, %s190
      %s194 = sphi 0, %s193
      %s210 = sphi 0, %s194
    $region4: #{tpu_custom_call.1} parent=1 // loop_header_branch
      %22 = sbr.rel (%p20) target = $region8
    $region5: #{tpu_custom_call.1} parent=1 // loop_body
      %s24 = ssub.s32 %s19, 1
      %s25 = ssub.s32 %s19, 2
      %s32 = sadd.s32 1, %s27
      %p33 = scmp.ge.s32.totalorder %s32, 1
      %s34 = scalar_select %p33, 0, %s32
      %s35 = sadd.s32 1, %s26
      %s36 = scalar_select %p33, %s35, %s26
      %p37 = scmp.ge.s32.totalorder %s36, 2
      %s38 = scalar_select %p37, 0, %s36
      %s39 = ssub.s32 %s26, %s38
      %s40 = ssub.s32 %s27, %s34
      %s41 = sor.u32 %s39, %s40
      %p42 = scmp.eq.s32.totalorder %s41, 0
      %s44 = sadd.s32 %s43, 1
      %s45 = scalar_select %p42, %s43, %s44
      %p48 = pneg %p42
      %p49 = scmp.eq.s32.totalorder %s19, 1
      %p50 = por %p48, %p49
      %p51 = scmp.ne.s32.totalorder %s43, %s46
      %p52 = scmp.eq.s32.totalorder %s19, 0
      %p53 = por %p51, %p52
      %p54 = scmp.ne.s32.totalorder %s43, %s46
      %p55 = scmp.eq.s32.totalorder %s24, 1
      %p56 = por %p54, %p55
      %p57 = scmp.ne.s32.totalorder %s46, %s47
      %p58 = scmp.eq.s32.totalorder %s24, 0
      %p59 = por %p57, %p58
      %p60 = scmp.ne.s32.totalorder %s46, %s47
      %p61 = scmp.eq.s32.totalorder %s25, 1
      %p62 = por %p60, %p61
      %p64 = scmp.ne.s32.totalorder %s47, %s63
      %p65 = scmp.eq.s32.totalorder %s25, 0
      %p66 = por %p64, %p65
      %s68 = sadd.s32 %s67, 1
      %p71 = scmp.eq.s32.totalorder %s19, 1
      %p72 = scmp.ne.s32.totalorder %s67, %s69
      %p73 = scmp.eq.s32.totalorder %s19, 0
      %p74 = por %p72, %p73
      %p75 = scmp.ne.s32.totalorder %s67, %s69
      %p76 = scmp.eq.s32.totalorder %s24, 1
      %p77 = por %p75, %p76
      %p78 = scmp.ne.s32.totalorder %s69, %s70
      %p79 = scmp.eq.s32.totalorder %s24, 0
      %p80 = por %p78, %p79
      %p81 = scmp.ne.s32.totalorder %s69, %s70
      %p82 = scmp.eq.s32.totalorder %s25, 1
      %p83 = por %p81, %p82
      %p85 = scmp.ne.s32.totalorder %s70, %s84
      %p86 = scmp.eq.s32.totalorder %s25, 0
      %p87 = por %p85, %p86
      %s89 = sadd.s32 %s88, 1
      %p92 = scmp.eq.s32.totalorder %s19, 1
      %p93 = scmp.ne.s32.totalorder %s88, %s90
      %p94 = scmp.eq.s32.totalorder %s19, 0
      %p95 = por %p93, %p94
      %p96 = scmp.ne.s32.totalorder %s88, %s90
      %p97 = scmp.eq.s32.totalorder %s24, 1
      %p98 = por %p96, %p97
      %p99 = scmp.ne.s32.totalorder %s90, %s91
      %p100 = scmp.eq.s32.totalorder %s24, 0
      %p101 = por %p99, %p100
      %p102 = scmp.ne.s32.totalorder %s90, %s91
      %p103 = scmp.eq.s32.totalorder %s25, 1
      %p104 = por %p102, %p103
      %p106 = scmp.ne.s32.totalorder %s91, %s105
      %p107 = scmp.eq.s32.totalorder %s25, 0
      %p108 = por %p106, %p107
      %s110 = sadd.s32 %s109, 1
      %p113 = scmp.eq.s32.totalorder %s19, 1
      %p114 = scmp.ne.s32.totalorder %s109, %s111
      %p115 = scmp.eq.s32.totalorder %s19, 0
      %p116 = por %p114, %p115
      %p117 = scmp.ne.s32.totalorder %s109, %s111
      %p118 = scmp.eq.s32.totalorder %s24, 1
      %p119 = por %p117, %p118
      %p120 = scmp.ne.s32.totalorder %s111, %s112
      %p121 = scmp.eq.s32.totalorder %s24, 0
      %p122 = por %p120, %p121
      %p123 = scmp.ne.s32.totalorder %s111, %s112
      %p124 = scmp.eq.s32.totalorder %s25, 1
      %p125 = por %p123, %p124
      %p127 = scmp.ne.s32.totalorder %s112, %s126
      %p128 = scmp.eq.s32.totalorder %s25, 0
      %p129 = por %p127, %p128
      %s130 = ssub.s32 %s26, %s38
      %s131 = ssub.s32 %s27, %s34
      %s132 = sor.u32 %s130, %s131
      %p133 = scmp.eq.s32.totalorder %s132, 0
      %s135 = sadd.s32 %s134, 1
      %s136 = scalar_select %p133, %s134, %s135
      %p139 = pneg %p133
      %p140 = scmp.eq.s32.totalorder %s19, 1
      %p141 = por %p139, %p140
      %p142 = scmp.ne.s32.totalorder %s134, %s137
      %p143 = scmp.eq.s32.totalorder %s19, 0
      %p144 = por %p142, %p143
      %p145 = scmp.ne.s32.totalorder %s134, %s137
      %p146 = scmp.eq.s32.totalorder %s24, 1
      %p147 = por %p145, %p146
      %p148 = scmp.ne.s32.totalorder %s137, %s138
      %p149 = scmp.eq.s32.totalorder %s24, 0
      %p150 = por %p148, %p149
      %p151 = scmp.ne.s32.totalorder %s137, %s138
      %p152 = scmp.eq.s32.totalorder %s25, 1
      %p153 = por %p151, %p152
      %p155 = scmp.ne.s32.totalorder %s138, %s154
      %p156 = scmp.eq.s32.totalorder %s25, 0
      %p157 = por %p155, %p156
      %s158 = ssub.s32 %s26, %s38
      %s159 = ssub.s32 %s27, %s34
      %s160 = sor.u32 %s158, %s159
      %p161 = scmp.eq.s32.totalorder %s160, 0
      %s163 = sadd.s32 %s162, 1
      %s164 = scalar_select %p161, %s162, %s163
      %p167 = pneg %p161
      %p168 = scmp.eq.s32.totalorder %s19, 1
      %p169 = por %p167, %p168
      %p170 = scmp.ne.s32.totalorder %s162, %s165
      %p171 = scmp.eq.s32.totalorder %s19, 0
      %p172 = por %p170, %p171
      %p173 = scmp.ne.s32.totalorder %s162, %s165
      %p174 = scmp.eq.s32.totalorder %s24, 1
      %p175 = por %p173, %p174
      %p176 = scmp.ne.s32.totalorder %s165, %s166
      %p177 = scmp.eq.s32.totalorder %s24, 0
      %p178 = por %p176, %p177
      %p179 = scmp.ne.s32.totalorder %s165, %s166
      %p180 = scmp.eq.s32.totalorder %s25, 1
      %p181 = por %p179, %p180
      %p183 = scmp.ne.s32.totalorder %s166, %s182
      %p184 = scmp.eq.s32.totalorder %s25, 0
      %p185 = por %p183, %p184
      %s186 = ssub.s32 %s26, %s38
      %s187 = ssub.s32 %s27, %s34
      %s188 = sor.u32 %s186, %s187
      %p189 = scmp.eq.s32.totalorder %s188, 0
      %s191 = sadd.s32 %s190, 1
      %s192 = scalar_select %p189, %s190, %s191
      %p195 = pneg %p189
      %p196 = scmp.eq.s32.totalorder %s19, 1
      %p197 = por %p195, %p196
      %p198 = scmp.ne.s32.totalorder %s190, %s193
      %p199 = scmp.eq.s32.totalorder %s19, 0
      %p200 = por %p198, %p199
      %p201 = scmp.ne.s32.totalorder %s190, %s193
      %p202 = scmp.eq.s32.totalorder %s24, 1
      %p203 = por %p201, %p202
      %p204 = scmp.ne.s32.totalorder %s193, %s194
      %p205 = scmp.eq.s32.totalorder %s24, 0
      %p206 = por %p204, %p205
      %p207 = scmp.ne.s32.totalorder %s193, %s194
      %p208 = scmp.eq.s32.totalorder %s25, 1
      %p209 = por %p207, %p208
      %p211 = scmp.ne.s32.totalorder %s194, %s210
      %p212 = scmp.eq.s32.totalorder %s25, 0
      %p213 = por %p211, %p212
      %p214 = scmp.le.s32.totalorder 1, %s19
      %p215 = scmp.lt.s32.totalorder %s19, 3
      %p216 = pnand %p214, %p215
      %p217 = pneg %p216
      // Predicated region
      $region9: #{tpu_custom_call.1} parent=5 // pred_check
        _
      $region10: #{tpu_custom_call.1} parent=5 // pred_check_branch
        %219 = sbr.rel (%p216) target = $region12
      $region11: #{tpu_custom_call.1} parent=5 // pred_region
        %s220 = ssub.s32 %s19, 1
        // Predicated region
        $region13: #{tpu_custom_call.1} parent=11 // pred_check
          %p221 = pneg %p80
        $region14: #{tpu_custom_call.1} parent=11 // pred_check_branch
          %223 = sbr.rel (%p221) target = $region16
        $region15: #{tpu_custom_call.1} parent=11 // pred_region
          _
        $region16: #{tpu_custom_call.1} parent=11 // pred_fallthru
          _
        // Predicated region
        $region17: #{tpu_custom_call.1} parent=11 // pred_check
          %p224 = pneg %p101
        $region18: #{tpu_custom_call.1} parent=11 // pred_check_branch
          %226 = sbr.rel (%p224) target = $region20
        $region19: #{tpu_custom_call.1} parent=11 // pred_region
          _
        $region20: #{tpu_custom_call.1} parent=11 // pred_fallthru
          _
        // Predicated region
        $region21: #{tpu_custom_call.1} parent=11 // pred_check
          %p227 = pneg %p122
        $region22: #{tpu_custom_call.1} parent=11 // pred_check_branch
          %229 = sbr.rel (%p227) target = $region24
        $region23: #{tpu_custom_call.1} parent=11 // pred_region
          _
        $region24: #{tpu_custom_call.1} parent=11 // pred_fallthru
          _
      $region12: #{tpu_custom_call.1} parent=5 // pred_fallthru
        _
      %p230 = scmp.lt.s32.totalorder %s19, 2
      // Predicated region
      $region25: #{tpu_custom_call.1} parent=5 // pred_check
        %p231 = pneg %p230
      $region26: #{tpu_custom_call.1} parent=5 // pred_check_branch
        %233 = sbr.rel (%p231) target = $region28
      $region27: #{tpu_custom_call.1} parent=5 // pred_region
        // Predicated region
        $region29: #{tpu_custom_call.1} parent=27 // pred_check
          %p234 = pneg %p53
        $region30: #{tpu_custom_call.1} parent=27 // pred_check_branch
          %236 = sbr.rel (%p234) target = $region32
        $region31: #{tpu_custom_call.1} parent=27 // pred_region
          %p237 = scmp.lt.s32.totalorder %s26, 1
          %s238 = scalar_select %p237, %s26, 1
          %p239 = scmp.lt.s32.totalorder %s27, 0
          %s240 = scalar_select %p239, %s27, 0
          %s241 = sadd.s32 %s240, %s238
          %s242 = smul.addr %s241, 8
          %s243 = scalar_lea.vmem %s0, %s242
        $region32: #{tpu_custom_call.1} parent=27 // pred_fallthru
          _
      $region28: #{tpu_custom_call.1} parent=5 // pred_fallthru
        _
      %p244 = scmp.le.s32.totalorder 1, %s19
      %p245 = scmp.lt.s32.totalorder %s19, 3
      %p246 = pnand %p244, %p245
      %p247 = pneg %p246
      // Predicated region
      $region33: #{tpu_custom_call.1} parent=5 // pred_check
        _
      $region34: #{tpu_custom_call.1} parent=5 // pred_check_branch
        %249 = sbr.rel (%p246) target = $region36
      $region35: #{tpu_custom_call.1} parent=5 // pred_region
        %s250 = ssub.s32 %s19, 1
        %p251 = scmp.lt.s32.totalorder %s28, 1
        %s252 = scalar_select %p251, %s28, 1
        %p253 = scmp.lt.s32.totalorder %s29, 0
        %s254 = scalar_select %p253, %s29, 0
        %s255 = sadd.s32 %s254, %s252
        %s256 = smul.addr %s255, 8
        %s257 = scalar_lea.vmem %s0, %s256
        %p258 = pneg %p59
        %p259 = pneg %p56
        %p260 = pneg %p80
        %p261 = pneg %p77
        %p262 = pneg %p101
        %p263 = pneg %p98
        %p264 = pneg %p122
        %p265 = pneg %p119
        %p266 = pneg %p150
        %p267 = pneg %p147
        %s268 = sand.u32 %s137, 1
        %s269 = scalar_lea.sflag [#allocation3], %s268
        %s270 = sand.u32 %s137, 1
        %s271 = smul.addr %s270, 8
        %s272 = scalar_lea.vmem [#allocation2], %s271
        %p273 = pneg %p178
        %p274 = pneg %p175
        %s275 = sand.u32 %s24, 1
        %s276 = scalar_lea.sflag [#allocation5], %s275
        %s277 = sand.u32 %s165, 1
        %s278 = smul.addr %s277, 8
        %s279 = scalar_lea.vmem [#allocation4], %s278
        %p280 = pneg %p206
        %p281 = pneg %p203
        %s282 = sand.u32 %s24, 1
        %s283 = scalar_lea.sflag [#allocation5], %s282
        %s284 = sand.u32 %s193, 1
        %s285 = smul.addr %s284, 8
        %s286 = scalar_lea.vmem [#allocation6], %s285
        %p287 = scmp.lt.s32.totalorder %s28, 1
        %s288 = scalar_select %p287, %s28, 1
        %p289 = scmp.lt.s32.totalorder %s29, 0
        %s290 = scalar_select %p289, %s29, 0
        %s291 = sadd.s32 %s290, %s288
        %s292 = smul.addr %s291, 8
        %s293 = scalar_lea.vmem %s0, %s292
        %v294 = vld [vmem:[%s293] sm:$0xff]
        %v295 = vld [vmem:[%s1] sm:$0xff]
        %v296 = vld [vmem:[%s1 + $0x8] sm:$0xff]
        %v297 = vld [vmem:[%s1 + $0x10] sm:$0xff]
        %v298 = vld [vmem:[%s1 + $0x18] sm:$0xff]
        %vm299 = vcmask 261120
        %v301 = vsel %vm299, %v294, 0
        %303 = vmatprep.subr.mxu0 0.0
        %304 = vmatpush1.msra.mxu0 0.0
        %305 = vmatprep.subr.mxu0 0.0
        %306 = vmatpush1.msra.mxu0 0.0
        %307 = vmatprep.subr.mxu0 0.0
        %308 = vmatpush1.msra.mxu0 0.0
        %309 = vmatprep.subr.mxu0 0.0
        %310 = vmatpush1.msra.mxu0 0.0
        %311 = vmatprep.subr.mxu0 0.0
        %312 = vmatpush1.msra.mxu0 0.0
        %313 = vmatprep.subr.mxu0 0.0
        %314 = vmatpush1.msra.mxu0 0.0
        %315 = vmatprep.subr.mxu0 0.0
        %316 = vmatpush1.msra.mxu0 0.0
        %317 = vmatprep.subr.mxu0 0.0
        %318 = vmatpush1.msra.mxu0 0.0
        %319 = vmatprep.subr.mxu0 0.0
        %320 = vmatpush1.msra.mxu0 0.0
        %321 = vmatprep.subr.mxu0 0.0
        %322 = vmatpush1.msra.mxu0 0.0
        %323 = vmatprep.subr.mxu0 0.0
        %324 = vmatpush1.msra.mxu0 0.0
        %325 = vmatprep.subr.mxu0 0.0
        %326 = vmatpush1.msra.mxu0 0.0
        %327 = vmatprep.subr.mxu0 0.0
        %328 = vmatpush1.msra.mxu0 %v298
        %329 = vmatprep.subr.mxu0 0.0
        %330 = vmatpush1.msra.mxu0 %v297
        %331 = vmatprep.subr.mxu0 0.0
        %332 = vmatpush1.msra.mxu0 %v296
        %333 = vmatprep.subr.mxu0 0.0
        %334 = vmatpush1.msra.mxu0 %v295
        %335 = vmatprep.subr.mxu0 0.0
        %336 = vmatpush2.msra.mxu0 0.0
        %337 = vmatprep.subr.mxu0 0.0
        %338 = vmatpush2.msra.mxu0 0.0
        %339 = vmatprep.subr.mxu0 0.0
        %340 = vmatpush2.msra.mxu0 0.0
        %341 = vmatprep.subr.mxu0 0.0
        %342 = vmatpush2.msra.mxu0 0.0
        %343 = vmatprep.subr.mxu0 0.0
        %344 = vmatpush2.msra.mxu0 0.0
        %345 = vmatprep.subr.mxu0 0.0
        %346 = vmatpush2.msra.mxu0 0.0
        %347 = vmatprep.subr.mxu0 0.0
        %348 = vmatpush2.msra.mxu0 0.0
        %349 = vmatprep.subr.mxu0 0.0
        %350 = vmatpush2.msra.mxu0 0.0
        %351 = vmatprep.subr.mxu0 0.0
        %352 = vmatpush2.msra.mxu0 0.0
        %353 = vmatprep.subr.mxu0 0.0
        %354 = vmatpush2.msra.mxu0 0.0
        %355 = vmatprep.subr.mxu0 0.0
        %356 = vmatpush2.msra.mxu0 0.0
        %357 = vmatprep.subr.mxu0 0.0
        %358 = vmatpush2.msra.mxu0 0.0
        %359 = vmatprep.subr.mxu0 0.0
        %360 = vmatpush2.msra.mxu0 0.0
        %361 = vmatprep.subr.mxu0 0.0
        %362 = vmatpush2.msra.mxu0 0.0
        %363 = vmatprep.subr.mxu0 0.0
        %364 = vmatpush2.msra.mxu0 0.0
        %365 = vmatprep.subr.mxu0 0.0
        %366 = vmatpush2.msra.mxu0 0.0
        %367 = vmatprep.mubr.f32.mxu0 0.0
        %368 = vmatmul.mubr.f32.gmra.mxu0 %v301
        %v369 = vpop.f32.mrf.mxu0
        %v370 = vadd.f32 0.0, %v369
        %v371 = vpop.f32.mrf.mxu0
        %372 = vdwg.mxu0
        %v373 = vmul.f32 %v370, 0.17677669
        %vm374 = vcmask 130048
        %375 = vst.msk [vmem:[%s272] sm:$0xff] %vm374, %v373
        %v376 = vld [vmem:[%s2] sm:$0xff]
        %v377 = vld [vmem:[%s2 + $0x8] sm:$0xff]
        %v378 = vld [vmem:[%s2 + $0x10] sm:$0xff]
        %v379 = vld [vmem:[%s2 + $0x18] sm:$0xff]
        %380 = vmatprep.subr.mxu0 0.0
        %381 = vmatpush1.msra.mxu0 0.0
        %382 = vmatprep.subr.mxu0 0.0
        %383 = vmatpush1.msra.mxu0 0.0
        %384 = vmatprep.subr.mxu0 0.0
        %385 = vmatpush1.msra.mxu0 0.0
        %386 = vmatprep.subr.mxu0 0.0
        %387 = vmatpush1.msra.mxu0 0.0
        %388 = vmatprep.subr.mxu0 0.0
        %389 = vmatpush1.msra.mxu0 0.0
        %390 = vmatprep.subr.mxu0 0.0
        %391 = vmatpush1.msra.mxu0 0.0
        %392 = vmatprep.subr.mxu0 0.0
        %393 = vmatpush1.msra.mxu0 0.0
        %394 = vmatprep.subr.mxu0 0.0
        %395 = vmatpush1.msra.mxu0 0.0
        %396 = vmatprep.subr.mxu0 0.0
        %397 = vmatpush1.msra.mxu0 0.0
        %398 = vmatprep.subr.mxu0 0.0
        %399 = vmatpush1.msra.mxu0 0.0
        %400 = vmatprep.subr.mxu0 0.0
        %401 = vmatpush1.msra.mxu0 0.0
        %402 = vmatprep.subr.mxu0 0.0
        %403 = vmatpush1.msra.mxu0 0.0
        %404 = vmatprep.subr.mxu0 0.0
        %405 = vmatpush1.msra.mxu0 %v379
        %406 = vmatprep.subr.mxu0 0.0
        %407 = vmatpush1.msra.mxu0 %v378
        %408 = vmatprep.subr.mxu0 0.0
        %409 = vmatpush1.msra.mxu0 %v377
        %410 = vmatprep.subr.mxu0 0.0
        %411 = vmatpush1.msra.mxu0 %v376
        %412 = vmatprep.subr.mxu0 0.0
        %413 = vmatpush2.msra.mxu0 0.0
        %414 = vmatprep.subr.mxu0 0.0
        %415 = vmatpush2.msra.mxu0 0.0
        %416 = vmatprep.subr.mxu0 0.0
        %417 = vmatpush2.msra.mxu0 0.0
        %418 = vmatprep.subr.mxu0 0.0
        %419 = vmatpush2.msra.mxu0 0.0
        %420 = vmatprep.subr.mxu0 0.0
        %421 = vmatpush2.msra.mxu0 0.0
        %422 = vmatprep.subr.mxu0 0.0
        %423 = vmatpush2.msra.mxu0 0.0
        %424 = vmatprep.subr.mxu0 0.0
        %425 = vmatpush2.msra.mxu0 0.0
        %426 = vmatprep.subr.mxu0 0.0
        %427 = vmatpush2.msra.mxu0 0.0
        %428 = vmatprep.subr.mxu0 0.0
        %429 = vmatpush2.msra.mxu0 0.0
        %430 = vmatprep.subr.mxu0 0.0
        %431 = vmatpush2.msra.mxu0 0.0
        %432 = vmatprep.subr.mxu0 0.0
        %433 = vmatpush2.msra.mxu0 0.0
        %434 = vmatprep.subr.mxu0 0.0
        %435 = vmatpush2.msra.mxu0 0.0
        %436 = vmatprep.subr.mxu0 0.0
        %437 = vmatpush2.msra.mxu0 0.0
        %438 = vmatprep.subr.mxu0 0.0
        %439 = vmatpush2.msra.mxu0 0.0
        %440 = vmatprep.subr.mxu0 0.0
        %441 = vmatpush2.msra.mxu0 0.0
        %442 = vmatprep.subr.mxu0 0.0
        %443 = vmatpush2.msra.mxu0 0.0
        %444 = vmatprep.mubr.f32.mxu0 0.0
        %445 = vmatmul.mubr.f32.gmra.mxu0 %v301
        %v446 = vpop.f32.mrf.mxu0
        %v447 = vadd.f32 0.0, %v446
        %v448 = vpop.f32.mrf.mxu0
        %449 = vdwg.mxu0
        %450 = vst.msk [vmem:[%s279] sm:$0xff] %vm374, %v447
        %v451 = vld [vmem:[%s3] sm:$0xff]
        %v452 = vld [vmem:[%s3 + $0x8] sm:$0xff]
        %v453 = vld [vmem:[%s3 + $0x10] sm:$0xff]
        %v454 = vld [vmem:[%s3 + $0x18] sm:$0xff]
        %455 = vmatprep.subr.mxu0 0.0
        %456 = vmatpush1.msra.mxu0 0.0
        %457 = vmatprep.subr.mxu0 0.0
        %458 = vmatpush1.msra.mxu0 0.0
        %459 = vmatprep.subr.mxu0 0.0
        %460 = vmatpush1.msra.mxu0 0.0
        %461 = vmatprep.subr.mxu0 0.0
        %462 = vmatpush1.msra.mxu0 0.0
        %463 = vmatprep.subr.mxu0 0.0
        %464 = vmatpush1.msra.mxu0 0.0
        %465 = vmatprep.subr.mxu0 0.0
        %466 = vmatpush1.msra.mxu0 0.0
        %467 = vmatprep.subr.mxu0 0.0
        %468 = vmatpush1.msra.mxu0 0.0
        %469 = vmatprep.subr.mxu0 0.0
        %470 = vmatpush1.msra.mxu0 0.0
        %471 = vmatprep.subr.mxu0 0.0
        %472 = vmatpush1.msra.mxu0 0.0
        %473 = vmatprep.subr.mxu0 0.0
        %474 = vmatpush1.msra.mxu0 0.0
        %475 = vmatprep.subr.mxu0 0.0
        %476 = vmatpush1.msra.mxu0 0.0
        %477 = vmatprep.subr.mxu0 0.0
        %478 = vmatpush1.msra.mxu0 0.0
        %479 = vmatprep.subr.mxu0 0.0
        %480 = vmatpush1.msra.mxu0 %v454
        %481 = vmatprep.subr.mxu0 0.0
        %482 = vmatpush1.msra.mxu0 %v453
        %483 = vmatprep.subr.mxu0 0.0
        %484 = vmatpush1.msra.mxu0 %v452
        %485 = vmatprep.subr.mxu0 0.0
        %486 = vmatpush1.msra.mxu0 %v451
        %487 = vmatprep.subr.mxu0 0.0
        %488 = vmatpush2.msra.mxu0 0.0
        %489 = vmatprep.subr.mxu0 0.0
        %490 = vmatpush2.msra.mxu0 0.0
        %491 = vmatprep.subr.mxu0 0.0
        %492 = vmatpush2.msra.mxu0 0.0
        %493 = vmatprep.subr.mxu0 0.0
        %494 = vmatpush2.msra.mxu0 0.0
        %495 = vmatprep.subr.mxu0 0.0
        %496 = vmatpush2.msra.mxu0 0.0
        %497 = vmatprep.subr.mxu0 0.0
        %498 = vmatpush2.msra.mxu0 0.0
        %499 = vmatprep.subr.mxu0 0.0
        %500 = vmatpush2.msra.mxu0 0.0
        %501 = vmatprep.subr.mxu0 0.0
        %502 = vmatpush2.msra.mxu0 0.0
        %503 = vmatprep.subr.mxu0 0.0
        %504 = vmatpush2.msra.mxu0 0.0
        %505 = vmatprep.subr.mxu0 0.0
        %506 = vmatpush2.msra.mxu0 0.0
        %507 = vmatprep.subr.mxu0 0.0
        %508 = vmatpush2.msra.mxu0 0.0
        %509 = vmatprep.subr.mxu0 0.0
        %510 = vmatpush2.msra.mxu0 0.0
        %511 = vmatprep.subr.mxu0 0.0
        %512 = vmatpush2.msra.mxu0 0.0
        %513 = vmatprep.subr.mxu0 0.0
        %514 = vmatpush2.msra.mxu0 0.0
        %515 = vmatprep.subr.mxu0 0.0
        %516 = vmatpush2.msra.mxu0 0.0
        %517 = vmatprep.subr.mxu0 0.0
        %518 = vmatpush2.msra.mxu0 0.0
        %519 = vmatprep.mubr.f32.mxu0 0.0
        %520 = vmatmul.mubr.f32.gmra.mxu0 %v301
        %v521 = vpop.f32.mrf.mxu0
        %v522 = vadd.f32 0.0, %v521
        %v523 = vpop.f32.mrf.mxu0
        %524 = vdwg.mxu0
        %525 = vst.msk [vmem:[%s286] sm:$0xff] %vm374, %v522
        %s526 = sand.u32 %s137, 1
        %s527 = scalar_lea.sflag [#allocation3], %s526
        %s528 = sand.u32 %s137, 1
        %s529 = smul.addr %s528, 8
        %s530 = scalar_lea.vmem [#allocation2], %s529
        %s531 = sand.u32 %s24, 1
        %s532 = scalar_lea.sflag [#allocation5], %s531
        %s533 = sand.u32 %s165, 1
        %s534 = smul.addr %s533, 8
        %s535 = scalar_lea.vmem [#allocation4], %s534
        %s536 = sand.u32 %s24, 1
        %s537 = scalar_lea.sflag [#allocation5], %s536
        %s538 = sand.u32 %s193, 1
        %s539 = smul.addr %s538, 8
        %s540 = scalar_lea.vmem [#allocation6], %s539
        // Predicated region
        $region37: #{tpu_custom_call.1} parent=35 // pred_check
          %p541 = pneg %p147
        $region38: #{tpu_custom_call.1} parent=35 // pred_check_branch
          %543 = sbr.rel (%p541) target = $region40
        $region39: #{tpu_custom_call.1} parent=35 // pred_region
          %s545 = ssub.s32 128, 128
          %546 = vsyncadd %s527, %s545
          %s547 = sadd.s32 %s29, %s28
          %s548 = smul.addr %s547, 128
          %s549 = scalar_lea.hbm %s4, %s548
          %s551 = sshll.u32 %s530, 4
          %s552 = int_to_ptr.vmem [resolvable:$true] %s551
          %554 = dma.vmem_to_hbm [thread:$0]  %s552, 128, %s549, %s527
        $region40: #{tpu_custom_call.1} parent=35 // pred_fallthru
          _
        // Predicated region
        $region41: #{tpu_custom_call.1} parent=35 // pred_check
          %p555 = pneg %p175
        $region42: #{tpu_custom_call.1} parent=35 // pred_check_branch
          %557 = sbr.rel (%p555) target = $region44
        $region43: #{tpu_custom_call.1} parent=35 // pred_region
          %s559 = ssub.s32 128, 128
          %560 = vsyncadd %s532, %s559
          %s561 = sadd.s32 %s29, %s28
          %s562 = smul.addr %s561, 128
          %s563 = scalar_lea.hbm %s5, %s562
          %s565 = sshll.u32 %s535, 4
          %s566 = int_to_ptr.vmem [resolvable:$true] %s565
          %568 = dma.vmem_to_hbm [thread:$0]  %s566, 128, %s563, %s532
        $region44: #{tpu_custom_call.1} parent=35 // pred_fallthru
          _
        // Predicated region
        $region45: #{tpu_custom_call.1} parent=35 // pred_check
          %p569 = pneg %p203
        $region46: #{tpu_custom_call.1} parent=35 // pred_check_branch
          %571 = sbr.rel (%p569) target = $region48
        $region47: #{tpu_custom_call.1} parent=35 // pred_region
          %s573 = ssub.s32 128, 128
          %574 = vsyncadd %s537, %s573
          %s575 = sadd.s32 %s29, %s28
          %s576 = smul.addr %s575, 128
          %s577 = scalar_lea.hbm %s6, %s576
          %s579 = sshll.u32 %s540, 4
          %s580 = int_to_ptr.vmem [resolvable:$true] %s579
          %582 = dma.vmem_to_hbm [thread:$0]  %s580, 128, %s577, %s537
        $region48: #{tpu_custom_call.1} parent=35 // pred_fallthru
          _
      $region36: #{tpu_custom_call.1} parent=5 // pred_fallthru
        _
      %p583 = scmp.le.s32.totalorder 2, %s19
      // Predicated region
      $region49: #{tpu_custom_call.1} parent=5 // pred_check
        %p584 = pneg %p583
      $region50: #{tpu_custom_call.1} parent=5 // pred_check_branch
        %586 = sbr.rel (%p584) target = $region52
      $region51: #{tpu_custom_call.1} parent=5 // pred_region
        %s587 = ssub.s32 %s19, 2
        // Predicated region
        $region53: #{tpu_custom_call.1} parent=51 // pred_check
          %p588 = pneg %p153
        $region54: #{tpu_custom_call.1} parent=51 // pred_check_branch
          %590 = sbr.rel (%p588) target = $region56
        $region55: #{tpu_custom_call.1} parent=51 // pred_region
          %s591 = sand.u32 %s138, 1
          %s592 = scalar_lea.sflag [#allocation3], %s591
          %s593 = sand.u32 %s138, 1
          %s594 = smul.addr %s593, 8
          %s595 = scalar_lea.vmem [#allocation2], %s594
          %596 = dma.done %s592, 128
        $region56: #{tpu_custom_call.1} parent=51 // pred_fallthru
          _
        // Predicated region
        $region57: #{tpu_custom_call.1} parent=51 // pred_check
          %p597 = pneg %p181
        $region58: #{tpu_custom_call.1} parent=51 // pred_check_branch
          %599 = sbr.rel (%p597) target = $region60
        $region59: #{tpu_custom_call.1} parent=51 // pred_region
          %s600 = sand.u32 %s25, 1
          %s601 = scalar_lea.sflag [#allocation5], %s600
          %s602 = sand.u32 %s166, 1
          %s603 = smul.addr %s602, 8
          %s604 = scalar_lea.vmem [#allocation4], %s603
          %605 = dma.done %s601, 128
        $region60: #{tpu_custom_call.1} parent=51 // pred_fallthru
          _
        // Predicated region
        $region61: #{tpu_custom_call.1} parent=51 // pred_check
          %p606 = pneg %p209
        $region62: #{tpu_custom_call.1} parent=51 // pred_check_branch
          %608 = sbr.rel (%p606) target = $region64
        $region63: #{tpu_custom_call.1} parent=51 // pred_region
          %s609 = sand.u32 %s25, 1
          %s610 = scalar_lea.sflag [#allocation5], %s609
          %s611 = sand.u32 %s194, 1
          %s612 = smul.addr %s611, 8
          %s613 = scalar_lea.vmem [#allocation6], %s612
          %614 = dma.done %s610, 128
        $region64: #{tpu_custom_call.1} parent=51 // pred_fallthru
          _
      $region52: #{tpu_custom_call.1} parent=5 // pred_fallthru
        _
    $region6: #{tpu_custom_call.1} parent=1 // loop_footer
      %s23 = sadd.s32 1, %s19
    $region7: #{tpu_custom_call.1} parent=1 // loop_footer_branch
      %18 = sbr.rel target = $region3
    $region8: #{tpu_custom_call.1} parent=1 // loop_exit
      _
    %615 = vsyncpa [#allocation3], 1
    %s616 = scalar_lea.sflag [#allocation3], 1
    %617 = vsyncpa %s616, 1
    %618 = vsyncpa [#allocation5], 1
    %s619 = scalar_lea.sflag [#allocation5], 1
    %620 = vsyncpa %s619, 1

</llo_original>
